<compile_context>
chip_gen: v7x
topology: tpu7x:2x2x1
jax: 0.10.0
libtpu: 0.0.40
codegen_flags: <defaults>
</compile_context>

<pallas_src>
import functools
import math

import jax
import jax.numpy as jnp
from jax.experimental import pallas as pl
from jax.experimental.pallas import tpu as pltpu

_VMEM_LIMIT_BYTES = 32 * 1024 * 1024    # <= default/physical on v5e/v6e/v7x
_TARGET_BLOCK_BYTES = 2 * 1024 * 1024   # ~2 MiB per input block (x2 inputs x2 bufs)
_MID_UNROLL_MAX = 16                    # unroll channel loop for tiny D


def _finalize(o_ref, sxy, sxx, syy, normalize):
    if normalize:
        eps = jnp.float32(1e-12)
        denom = (jnp.maximum(jnp.sqrt(sxx), eps) *
                 jnp.maximum(jnp.sqrt(syy), eps))
        o_ref[...] = (sxy / denom).astype(o_ref.dtype)
    else:
        o_ref[...] = sxy.astype(o_ref.dtype)


def _row_tile(num_rows: int, padded_row_bytes: int) -> int:
    """Row tile: multiple of 8 (or the full row count), ~2 MiB per input block."""
    if num_rows <= 8:
        return num_rows
    tm = min(num_rows, max(8, _TARGET_BLOCK_BYTES // padded_row_bytes))
    return max(8, (tm // 8) * 8)


# ---------------------------------------------------------------------------
# Fast path (dim == last, small D with 128 % D == 0).  Inputs arrive repacked
# as (Mr, 128) = reshape(M, D); each packed row holds R = 128/D original rows.
# The segmented lane sum is a matmul with a static (128, R) 0/1 matrix (MXU).
# ---------------------------------------------------------------------------
def _packed_dot_kernel(x_ref, y_ref, seg_ref, o_ref, *, normalize: bool):
    x = x_ref[...].astype(jnp.float32)     # (tm, 128) lane-dense
    y = y_ref[...].astype(jnp.float32)
    seg = seg_ref[...]                     # (128, R) 0/1 segment-sum matrix
    sxy = jnp.dot(x * y, seg, preferred_element_type=jnp.float32)   # (tm, R)
    sxx = syy = None
    if normalize:
        sxx = jnp.dot(x * x, seg, preferred_element_type=jnp.float32)
        syy = jnp.dot(y * y, seg, preferred_element_type=jnp.float32)
    _finalize(o_ref, sxy, sxx, syy, normalize)


def _dot_rows_packed(xp, yp, d, normalize, out_dtype):
    mr, lanes = xp.shape                   # lanes == 128
    r = lanes // d
    tm = _row_tile(mr, lanes * 4)
    grid = (pl.cdiv(mr, tm),)

    # seg[l, j] = 1 iff lane l belongs to segment j (l // d == j)
    lane = jax.lax.broadcasted_iota(jnp.int32, (lanes, r), 0)
    col = jax.lax.broadcasted_iota(jnp.int32, (lanes, r), 1)
    seg = (lane // d == col).astype(jnp.float32)

    out = pl.pallas_call(
        functools.partial(_packed_dot_kernel, normalize=normalize),
        out_shape=jax.ShapeDtypeStruct((mr, r), out_dtype),
        grid_spec=pltpu.PrefetchScalarGridSpec(
            num_scalar_prefetch=0,
            grid=grid,
            in_specs=[
                pl.BlockSpec((tm, lanes), lambda i: (i, 0)),
                pl.BlockSpec((tm, lanes), lambda i: (i, 0)),
                pl.BlockSpec((lanes, r), lambda i: (0, 0)),
            ],
            out_specs=pl.BlockSpec((tm, r), lambda i: (i, 0)),
        ),
        compiler_params=pltpu.CompilerParams(
            dimension_semantics=("parallel",),
            vmem_limit_bytes=_VMEM_LIMIT_BYTES,
        ),
    )(xp, yp, seg)
    # packed row rr, segment j  <->  original row rr * r + j  -> row-major reshape
    return out.reshape(mr * r)


# ---------------------------------------------------------------------------
# Generic last-dim path: arbitrary D (lane-dense whenever D >= 128).
# ---------------------------------------------------------------------------
def _generic_dot_kernel(x_ref, y_ref, o_ref, *, normalize: bool):
    x = x_ref[...].astype(jnp.float32)     # (tm, D)
    y = y_ref[...].astype(jnp.float32)
    sxy = jnp.sum(x * y, axis=-1, keepdims=True)
    sxx = syy = None
    if normalize:
        sxx = jnp.sum(x * x, axis=-1, keepdims=True)
        syy = jnp.sum(y * y, axis=-1, keepdims=True)
    _finalize(o_ref, sxy, sxx, syy, normalize)


def _dot_rows_generic(x2d, y2d, normalize, out_dtype):
    m, d = x2d.shape
    padded_row_bytes = ((d + 127) // 128) * 128 * 4   # lane padding in VMEM
    # TODO(synk): for D so large that even an 8-row block overflows VMEM,
    # add a reduction grid axis over D with an accumulator (P3 pattern).
    tm = _row_tile(m, padded_row_bytes)
    grid = (pl.cdiv(m, tm),)
    out = pl.pallas_call(
        functools.partial(_generic_dot_kernel, normalize=normalize),
        out_shape=jax.ShapeDtypeStruct((m, 1), out_dtype),
        grid_spec=pltpu.PrefetchScalarGridSpec(
            num_scalar_prefetch=0,
            grid=grid,
            in_specs=[
                pl.BlockSpec((tm, d), lambda i: (i, 0)),
                pl.BlockSpec((tm, d), lambda i: (i, 0)),
            ],
            out_specs=pl.BlockSpec((tm, 1), lambda i: (i, 0)),
        ),
        compiler_params=pltpu.CompilerParams(
            dimension_semantics=("parallel",),
            vmem_limit_bytes=_VMEM_LIMIT_BYTES,
        ),
    )(x2d, y2d)
    return out.reshape(m)


# ---------------------------------------------------------------------------
# Mid-axis path: dim is NOT last.  View as (outer, D, inner); keep `inner` on
# lanes, reduce D (the block's sublane axis) in-kernel.  No moveaxis copy.
# ---------------------------------------------------------------------------
def _mid_dot_kernel(x_ref, y_ref, o_ref, *, d: int, normalize: bool):
    x = x_ref[...].astype(jnp.float32)     # (to, D, ti)
    y = y_ref[...].astype(jnp.float32)

    def reduce_d(p):
        if d <= _MID_UNROLL_MAX:
            acc = p[:, 0, :]
            for c in range(1, d):
                acc = acc + p[:, c, :]
            return acc
        return jnp.sum(p, axis=1)

    sxy = reduce_d(x * y)
    sxx = reduce_d(x * x) if normalize else None
    syy = reduce_d(y * y) if normalize else None
    _finalize(o_ref, sxy, sxx, syy, normalize)


def _mid_tiles(outer: int, d: int, inner: int):
    d_pad = ((d + 7) // 8) * 8             # sublane padding in VMEM
    if inner >= 128:
        ti = min((inner // 128) * 128, 2048)
    else:
        ti = inner
    min_to = outer if outer <= 8 else 8
    # Shrink the lane tile until even the minimal block stays near the target.
    while ti > 128 and min_to * d_pad * ti * 4 > _TARGET_BLOCK_BYTES:
        ti -= 128
    if outer <= 8:
        to = outer
    else:
        to = (_TARGET_BLOCK_BYTES // 4) // max(1, d_pad * ti)
        to = max(8, min((outer // 8) * 8, (to // 8) * 8))
    # TODO(synk): for D so large that a full-D block cannot fit VMEM, put D on
    # the grid as an "arbitrary" axis with VMEM accumulators.
    return to, ti


def _dot_mid(x3, y3, normalize, out_dtype):
    outer, d, inner = x3.shape
    to, ti = _mid_tiles(outer, d, inner)
    grid = (pl.cdiv(outer, to), pl.cdiv(inner, ti))
    return pl.pallas_call(
        functools.partial(_mid_dot_kernel, d=d, normalize=normalize),
        out_shape=jax.ShapeDtypeStruct((outer, inner), out_dtype),
        grid_spec=pltpu.PrefetchScalarGridSpec(
            num_scalar_prefetch=0,
            grid=grid,
            in_specs=[
                pl.BlockSpec((to, d, ti), lambda o, i: (o, 0, i)),
                pl.BlockSpec((to, d, ti), lambda o, i: (o, 0, i)),
            ],
            out_specs=pl.BlockSpec((to, ti), lambda o, i: (o, i)),
        ),
        compiler_params=pltpu.CompilerParams(
            dimension_semantics=("parallel", "parallel"),
            vmem_limit_bytes=_VMEM_LIMIT_BYTES,
        ),
    )(x3, y3)


def dot(x: jax.Array, y: jax.Array, dim: int = -1, normalize: bool = False,
        keep_dim: bool = False) -> jax.Array:
    """JAX/Pallas equivalent of the Dot torch module forward pass."""
    ndims = x.ndim
    axis = dim % ndims
    out_dtype = jnp.result_type(x.dtype, y.dtype)
    shape = x.shape

    if axis == ndims - 1:
        lead_shape = shape[:-1]
        d = shape[-1]
        m = math.prod(lead_shape)
        if 0 < d < 128 and 128 % d == 0 and (m * d) % 128 == 0 and m * d >= 128:
            mr = (m * d) // 128
            out_flat = _dot_rows_packed(
                x.reshape(mr, 128), y.reshape(mr, 128), d, normalize, out_dtype)
        else:
            out_flat = _dot_rows_generic(
                x.reshape(m, d), y.reshape(m, d), normalize, out_dtype)
        ret = out_flat.reshape(lead_shape)
    else:
        outer = math.prod(shape[:axis])
        d = shape[axis]
        inner = math.prod(shape[axis + 1:])
        out2d = _dot_mid(x.reshape(outer, d, inner), y.reshape(outer, d, inner),
                         normalize, out_dtype)
        ret = out2d.reshape(shape[:axis] + shape[axis + 1:])

    if keep_dim:
        ret = jnp.expand_dims(ret, axis)
    return ret


def _reference(x, y, dim=-1, normalize=False, keep_dim=False):
    axis = dim % x.ndim
    if normalize:
        eps = 1e-12
        xn = jnp.sqrt(jnp.sum(x * x, axis=axis, keepdims=True))
        yn = jnp.sqrt(jnp.sum(y * y, axis=axis, keepdims=True))
        x = x / jnp.maximum(xn, eps)
        y = y / jnp.maximum(yn, eps)
    ret = jnp.sum(x * y, axis=axis)
    return jnp.expand_dims(ret, axis) if keep_dim else ret


if __name__ == "__main__":
    key = jax.random.PRNGKey(0)
    kx, ky, kx2, ky2 = jax.random.split(key, 4)

    # NCHW-style small example from the module's typical use.
    shape = (2, 4, 16, 16)
    x = jax.random.normal(kx, shape, dtype=jnp.float32)
    y = jax.random.normal(ky, shape, dtype=jnp.float32)

    # 1) default config (dim=-1, normalize=False, keep_dim=False) -> packed path
    out = jax.block_until_ready(dot(x, y, dim=-1, normalize=False, keep_dim=False))
    ref = _reference(x, y, dim=-1, normalize=False, keep_dim=False)
    assert out.shape == ref.shape, (out.shape, ref.shape)
    assert jnp.allclose(out, ref, atol=1e-4, rtol=1e-4)

    # 2) normalized + keep_dim (cosine-similarity style) -> packed path
    out_n = jax.block_until_ready(dot(x, y, dim=-1, normalize=True, keep_dim=True))
    ref_n = _reference(x, y, dim=-1, normalize=True, keep_dim=True)
    assert out_n.shape == ref_n.shape, (out_n.shape, ref_n.shape)
    assert jnp.allclose(out_n, ref_n, atol=1e-4, rtol=1e-4)

    # 3) reduce over channel dim (dim=1) -> NEW mid-axis path (no moveaxis copy)
    out_c = jax.block_until_ready(dot(x, y, dim=1, normalize=False, keep_dim=False))
    ref_c = _reference(x, y, dim=1, normalize=False, keep_dim=False)
    assert out_c.shape == ref_c.shape, (out_c.shape, ref_c.shape)
    assert jnp.allclose(out_c, ref_c, atol=1e-4, rtol=1e-4)

    # 3b) same but normalized + keep_dim
    out_cn = jax.block_until_ready(dot(x, y, dim=1, normalize=True, keep_dim=True))
    ref_cn = _reference(x, y, dim=1, normalize=True, keep_dim=True)
    assert out_cn.shape == ref_cn.shape, (out_cn.shape, ref_cn.shape)
    assert jnp.allclose(out_cn, ref_cn, atol=1e-4, rtol=1e-4)

    # 4) D that does not divide 128 -> generic fallback path
    shape2 = (2, 4, 16, 24)
    x2 = jax.random.normal(kx2, shape2, dtype=jnp.float32)
    y2 = jax.random.normal(ky2, shape2, dtype=jnp.float32)
    out_g = jax.block_until_ready(dot(x2, y2, dim=-1, normalize=True, keep_dim=False))
    ref_g = _reference(x2, y2, dim=-1, normalize=True, keep_dim=False)
    assert out_g.shape == ref_g.shape, (out_g.shape, ref_g.shape)
    assert jnp.allclose(out_g, ref_g, atol=1e-4, rtol=1e-4)

    print("KERNEL_OK")
</pallas_src>

<mosaic_0001>
module attributes {stable_mosaic.version = 11 : i64} {
  func.func @_packed_dot_kernel(%arg0: i32, %arg1: memref<16x128xf32, #tpu.memory_space<vmem>>, %arg2: memref<16x128xf32, #tpu.memory_space<vmem>>, %arg3: memref<128x8xf32, #tpu.memory_space<vmem>>, %arg4: memref<16x8xf32, #tpu.memory_space<vmem>>) attributes {dimension_semantics = [#tpu.dimension_semantics<parallel>], iteration_bounds = array<i64: 1>, scalar_prefetch = 0 : i64, scratch_operands = 0 : i64, tpu.core_type = #tpu.core_type<tc>, window_params = [{transform_indices = @transform_0, window_bounds = array<i64: 16, 128>}, {transform_indices = @transform_1, window_bounds = array<i64: 16, 128>}, {pipeline_mode = #tpu.pipeline_mode<synchronous>, transform_indices = @transform_2, window_bounds = array<i64: 128, 8>}, {transform_indices = @transform_3, window_bounds = array<i64: 16, 8>}]} {
    %c0 = arith.constant 0 : index
    %c0_0 = arith.constant 0 : index
    %0 = vector.load %arg1[%c0, %c0_0] : memref<16x128xf32, #tpu.memory_space<vmem>>, vector<16x128xf32>
    %c0_1 = arith.constant 0 : index
    %c0_2 = arith.constant 0 : index
    %1 = vector.load %arg2[%c0_1, %c0_2] : memref<16x128xf32, #tpu.memory_space<vmem>>, vector<16x128xf32>
    %c0_3 = arith.constant 0 : index
    %c0_4 = arith.constant 0 : index
    %2 = vector.load %arg3[%c0_3, %c0_4] : memref<128x8xf32, #tpu.memory_space<vmem>>, vector<128x8xf32>
    %3 = arith.mulf %0, %1 : vector<16x128xf32>
    %cst = arith.constant dense<0.000000e+00> : vector<16x8xf32>
    %4 = tpu.matmul %3, %2, %cst {dimension_numbers = #tpu.dot_dimension_numbers<[1], [0], [0], [1], [0, 0, 1, 1], [], []>} : vector<16x128xf32>, vector<128x8xf32>, vector<16x8xf32> -> vector<16x8xf32>
    %c0_5 = arith.constant 0 : index
    %c0_6 = arith.constant 0 : index
    %5 = vector.load %arg4[%c0_5, %c0_6] : memref<16x8xf32, #tpu.memory_space<vmem>>, vector<16x8xf32>
    tpu.vector_store %arg4[%c0_5, %c0_6], %4 {strides = array<i32>} : memref<16x8xf32, #tpu.memory_space<vmem>>, vector<16x8xf32>,
    return
  }
  func.func @transform_0(%arg0: i32) -> (i32, i32) {
    %c0_i32 = arith.constant 0 : i32
    %c0_i32_0 = arith.constant 0 : i32
    return %arg0, %c0_i32 : i32, i32
  }
  func.func @transform_1(%arg0: i32) -> (i32, i32) {
    %c0_i32 = arith.constant 0 : i32
    %c0_i32_0 = arith.constant 0 : i32
    return %arg0, %c0_i32 : i32, i32
  }
  func.func @transform_2(%arg0: i32) -> (i32, i32) {
    %c0_i32 = arith.constant 0 : i32
    %c0_i32_0 = arith.constant 0 : i32
    %c0_i32_1 = arith.constant 0 : i32
    return %c0_i32, %c0_i32_0 : i32, i32
  }
  func.func @transform_3(%arg0: i32) -> (i32, i32) {
    %c0_i32 = arith.constant 0 : i32
    %c0_i32_0 = arith.constant 0 : i32
    return %arg0, %c0_i32 : i32, i32
  }
}

</mosaic_0001>

<llo_original>
// kernel: tpu_custom_call.1
$region0: #{tpu_custom_call.1}
  #allocation0 [shape = 'u32[]', space=smem, size = 0x4, offset = 0x4, fixed_abs, tag = 'smem constant byte address 0x4 - core index']
  #allocation1 [shape = 'u32[144,128]{1,0:T(1,128)}', space=vmem, size = 0x12000, scoped, tag = 'internal scratch']
  %s0 = inlined_call_operand.vmem [shape: f32[16,128], index: 0, kind: input, shape index: {}]
  %s1 = inlined_call_operand.vmem [shape: f32[16,128], index: 1, kind: input, shape index: {}]
  %s2 = inlined_call_operand.vmem [shape: f32[128,8], index: 2, kind: input, shape index: {}]
  %s3 = inlined_call_operand.vmem [shape: f32[16,8], index: 3, kind: output, shape index: {}]
  %s4 = sld [smem:[#allocation0]]
  $region22: #{tpu_custom_call.1} parent=0
    _
  %s6 = ssub.s32 1, %s4
  %s7 = scalar_select 0, %s6, %s4
  // Predicated region
  $region2: #{tpu_custom_call.1} parent=0 // pred_check
    _
  $region3: #{tpu_custom_call.1} parent=0 // pred_check_branch
    %9 = sbr.rel (0) target = $region5
  $region4: #{tpu_custom_call.1} parent=0 // pred_region
    _
  $region5: #{tpu_custom_call.1} parent=0 // pred_fallthru
    _
  // Predicated region
  $region6: #{tpu_custom_call.1} parent=0 // pred_check
    _
  $region7: #{tpu_custom_call.1} parent=0 // pred_check_branch
    %11 = sbr.rel (0) target = $region9
  $region8: #{tpu_custom_call.1} parent=0 // pred_region
    _
  $region9: #{tpu_custom_call.1} parent=0 // pred_fallthru
    _
  // Predicated region
  $region10: #{tpu_custom_call.1} parent=0 // pred_check
    _
  $region11: #{tpu_custom_call.1} parent=0 // pred_check_branch
    %13 = sbr.rel (0) target = $region13
  $region12: #{tpu_custom_call.1} parent=0 // pred_region
    _
  $region13: #{tpu_custom_call.1} parent=0 // pred_fallthru
    _
  %v14 = vld [vmem:[%s0] sm:$0xff]
  %v15 = vld [vmem:[%s0 + $0x8] sm:$0xff]
  %v16 = vld [vmem:[%s1] sm:$0xff]
  %v17 = vld [vmem:[%s1 + $0x8] sm:$0xff]
  %v18 = vld [vmem:[%s2] sm:$0xff]
  %v19 = vld [vmem:[%s2 + $0x8] sm:$0xff]
  %v20 = vld [vmem:[%s2 + $0x10] sm:$0xff]
  %v21 = vld [vmem:[%s2 + $0x18] sm:$0xff]
  %v22 = vld [vmem:[%s2 + $0x20] sm:$0xff]
  %v23 = vld [vmem:[%s2 + $0x28] sm:$0xff]
  %v24 = vld [vmem:[%s2 + $0x30] sm:$0xff]
  %v25 = vld [vmem:[%s2 + $0x38] sm:$0xff]
  %v26 = vld [vmem:[%s2 + $0x40] sm:$0xff]
  %v27 = vld [vmem:[%s2 + $0x48] sm:$0xff]
  %v28 = vld [vmem:[%s2 + $0x50] sm:$0xff]
  %v29 = vld [vmem:[%s2 + $0x58] sm:$0xff]
  %v30 = vld [vmem:[%s2 + $0x60] sm:$0xff]
  %v31 = vld [vmem:[%s2 + $0x68] sm:$0xff]
  %v32 = vld [vmem:[%s2 + $0x70] sm:$0xff]
  %v33 = vld [vmem:[%s2 + $0x78] sm:$0xff]
  %v34 = vmul.f32 %v14, %v16
  %v35 = vmul.f32 %v15, %v17
  %36 = vmatprep.subr.mxu0 0.0
  %37 = vmatpush1.msra.mxu0 %v18
  %38 = vmatprep.subr.mxu0 0.0
  %39 = vmatpush1.msra.mxu0 %v19
  %40 = vmatprep.subr.mxu0 0.0
  %41 = vmatpush1.msra.mxu0 %v20
  %42 = vmatprep.subr.mxu0 0.0
  %43 = vmatpush1.msra.mxu0 %v21
  %44 = vmatprep.subr.mxu0 0.0
  %45 = vmatpush1.msra.mxu0 %v22
  %46 = vmatprep.subr.mxu0 0.0
  %47 = vmatpush1.msra.mxu0 %v23
  %48 = vmatprep.subr.mxu0 0.0
  %49 = vmatpush1.msra.mxu0 %v24
  %50 = vmatprep.subr.mxu0 0.0
  %51 = vmatpush1.msra.mxu0 %v25
  %52 = vmatprep.subr.mxu0 0.0
  %53 = vmatpush1.msra.mxu0 %v26
  %54 = vmatprep.subr.mxu0 0.0
  %55 = vmatpush1.msra.mxu0 %v27
  %56 = vmatprep.subr.mxu0 0.0
  %57 = vmatpush1.msra.mxu0 %v28
  %58 = vmatprep.subr.mxu0 0.0
  %59 = vmatpush1.msra.mxu0 %v29
  %60 = vmatprep.subr.mxu0 0.0
  %61 = vmatpush1.msra.mxu0 %v30
  %62 = vmatprep.subr.mxu0 0.0
  %63 = vmatpush1.msra.mxu0 %v31
  %64 = vmatprep.subr.mxu0 0.0
  %65 = vmatpush1.msra.mxu0 %v32
  %66 = vmatprep.subr.mxu0 0.0
  %67 = vmatpush1.msra.mxu0 %v33
  %68 = vmatprep.subr.mxu0 0.0
  %69 = vmatpush1.msra.mxu0 0.0
  %70 = vmatprep.subr.mxu0 0.0
  %71 = vmatpush1.msra.mxu0 0.0
  %72 = vmatprep.subr.mxu0 0.0
  %73 = vmatpush1.msra.mxu0 0.0
  %74 = vmatprep.subr.mxu0 0.0
  %75 = vmatpush1.msra.mxu0 0.0
  %76 = vmatprep.subr.mxu0 0.0
  %77 = vmatpush1.msra.mxu0 0.0
  %78 = vmatprep.subr.mxu0 0.0
  %79 = vmatpush1.msra.mxu0 0.0
  %80 = vmatprep.subr.mxu0 0.0
  %81 = vmatpush1.msra.mxu0 0.0
  %82 = vmatprep.subr.mxu0 0.0
  %83 = vmatpush1.msra.mxu0 0.0
  %84 = vmatprep.subr.mxu0 0.0
  %85 = vmatpush1.msra.mxu0 0.0
  %86 = vmatprep.subr.mxu0 0.0
  %87 = vmatpush1.msra.mxu0 0.0
  %88 = vmatprep.subr.mxu0 0.0
  %89 = vmatpush1.msra.mxu0 0.0
  %90 = vmatprep.subr.mxu0 0.0
  %91 = vmatpush1.msra.mxu0 0.0
  %92 = vmatprep.subr.mxu0 0.0
  %93 = vmatpush1.msra.mxu0 0.0
  %94 = vmatprep.subr.mxu0 0.0
  %95 = vmatpush1.msra.mxu0 0.0
  %96 = vmatprep.subr.mxu0 0.0
  %97 = vmatpush1.msra.mxu0 0.0
  %98 = vmatprep.subr.mxu0 0.0
  %99 = vmatpush1.msra.mxu0 0.0
  %100 = vmatprep.mubr.f32.mxu0 0.0
  %101 = vmatmul.mubr.f32.gmra.mrb[0].mxu0 %v34
  %v102 = vpop.f32.mrb[0].mxu0
  %v103 = vadd.f32 0.0, %v102
  %v104 = vpop.f32.mrb[0].mxu0
  %105 = vmatprep.mubr.f32.mxu0 0.0
  %106 = vmatmul.mubr.f32.gmra.mrb[0].mxu0 %v35
  %v107 = vpop.f32.mrb[0].mxu0
  %v108 = vadd.f32 0.0, %v107
  %v109 = vpop.f32.mrb[0].mxu0
  %110 = vdwg.mxu0
  %vm111 = vcmask 64512
  %112 = vst.msk [vmem:[%s3] sm:$0xff] %vm111, %v103
  %113 = vst.msk [vmem:[%s3 + $0x8] sm:$0xff] %vm111, %v108
  // Predicated region
  $region14: #{tpu_custom_call.1} parent=0 // pred_check
    _
  $region15: #{tpu_custom_call.1} parent=0 // pred_check_branch
    %115 = sbr.rel (0) target = $region17
  $region16: #{tpu_custom_call.1} parent=0 // pred_region
    _
  $region17: #{tpu_custom_call.1} parent=0 // pred_fallthru
    _
  // Predicated region
  $region18: #{tpu_custom_call.1} parent=0 // pred_check
    _
  $region19: #{tpu_custom_call.1} parent=0 // pred_check_branch
    %117 = sbr.rel (0) target = $region21
  $region20: #{tpu_custom_call.1} parent=0 // pred_region
    _
  $region21: #{tpu_custom_call.1} parent=0 // pred_fallthru
    _

</llo_original>
